<compile_context>
chip_gen: v5e
topology: v5e:2x2
jax: 0.10.0
libtpu: 0.0.40
codegen_flags: <defaults>
</compile_context>

<pallas_src>
import jax
import jax.numpy as jnp
from jax.experimental import pallas as pl
from jax.experimental.pallas import tpu as pltpu


def _round_up(v, m):
    return ((v + m - 1) // m) * m


# --------------------------------------------------------------------------- #
# Kernel 1: SAGEConv1 + ReLU
#   grid = (row_tiles, col_tiles); col axis is the reduction over A's columns.
# --------------------------------------------------------------------------- #
def _conv1_kernel(a_ref, xc_ref, xr_ref, wcat_ref, b_ref, h1_ref, acc_ref):
    k = pl.program_id(1)

    @pl.when(k == 0)
    def _():
        acc_ref[...] = jnp.zeros_like(acc_ref)

    # bf16 x bf16 -> f32 accumulate on the MXU (the O(N^2) part).
    acc_ref[...] += jnp.dot(a_ref[...], xc_ref[...],
                            preferred_element_type=jnp.float32)

    @pl.when(k == pl.num_programs(1) - 1)
    def _():
        x_root = xr_ref[...].astype(jnp.float32)
        # Fused lin_l / lin_r: [agg | x_root] @ [[W_l];[W_r]] + b_l
        cat = jnp.concatenate([acc_ref[...], x_root], axis=1)
        h = jnp.dot(cat, wcat_ref[...],
                    preferred_element_type=jnp.float32) + b_ref[...]
        h1_ref[...] = jnp.maximum(h, 0.0).astype(h1_ref.dtype)


# --------------------------------------------------------------------------- #
# Kernel 2: SAGEConv2 + ReLU + final Linear (fused).
# --------------------------------------------------------------------------- #
def _conv2_lin_kernel(a_ref, hc_ref, hr_ref, wcat_ref, b_ref, w3_ref, b3_ref,
                      out_ref, acc_ref):
    k = pl.program_id(1)

    @pl.when(k == 0)
    def _():
        acc_ref[...] = jnp.zeros_like(acc_ref)

    acc_ref[...] += jnp.dot(a_ref[...], hc_ref[...],
                            preferred_element_type=jnp.float32)

    @pl.when(k == pl.num_programs(1) - 1)
    def _():
        h_root = hr_ref[...].astype(jnp.float32)
        cat = jnp.concatenate([acc_ref[...], h_root], axis=1)
        h2 = jnp.dot(cat, wcat_ref[...],
                     preferred_element_type=jnp.float32) + b_ref[...]
        h2 = jnp.maximum(h2, 0.0)
        out_ref[...] = (jnp.dot(h2, w3_ref[...],
                                preferred_element_type=jnp.float32)
                        + b3_ref[...]).astype(out_ref.dtype)


# --------------------------------------------------------------------------- #
# Wrapper
# --------------------------------------------------------------------------- #
def build_normalized_adjacency(edge_index, num_nodes):
    """Row-normalized dense adjacency. Build ONCE per graph and reuse
    (the O(N^2) scatter is off the per-forward critical path)."""
    src, dst = edge_index[0], edge_index[1]
    adj = jnp.zeros((num_nodes, num_nodes), jnp.float32).at[dst, src].add(1.0)
    deg = jnp.sum(adj, axis=1, keepdims=True)
    return adj / jnp.maximum(deg, 1.0)


def graphsage_regressor(x, A, params):
    """x: (N, in_dim) f32, A: (N, N) row-normalized adjacency (from
    build_normalized_adjacency). Returns (N, out_dim) f32."""
    N, in_dim = x.shape
    hidden = params["wl1"].shape[1]
    out_dim = params["w3"].shape[1]

    # ---- tile sizes & lane-dense padding -----------------------------------
    if N <= 1024:
        TM, TK = 128, 128            # small graphs: single/few tiles
    else:
        TM, TK = 256, 512            # larger K per tile -> higher arith intensity
    NP = _round_up(N, max(TM, TK))   # node dim padded to tile multiple
    FP = _round_up(in_dim, 128)      # lane-dense feature dims
    HP = _round_up(hidden, 128)
    OP = _round_up(out_dim, 128)

    f32, bf16 = jnp.float32, jnp.bfloat16

    # bf16 adjacency / features for the big aggregation matmuls.
    A_p = jnp.zeros((NP, NP), bf16).at[:N, :N].set(A.astype(bf16))
    x_p = jnp.zeros((NP, FP), bf16).at[:N, :in_dim].set(x.astype(bf16))

    # Fused per-layer weights [[W_l];[W_r]] (padded, zero elsewhere).
    wcat1 = jnp.zeros((2 * FP, HP), f32)
    wcat1 = wcat1.at[:in_dim, :hidden].set(params["wl1"])
    wcat1 = wcat1.at[FP:FP + in_dim, :hidden].set(params["wr1"])
    b1 = jnp.zeros((1, HP), f32).at[:, :hidden].set(params["bl1"])

    wcat2 = jnp.zeros((2 * HP, HP), f32)
    wcat2 = wcat2.at[:hidden, :hidden].set(params["wl2"])
    wcat2 = wcat2.at[HP:HP + hidden, :hidden].set(params["wr2"])
    b2 = jnp.zeros((1, HP), f32).at[:, :hidden].set(params["bl2"])

    w3 = jnp.zeros((HP, OP), f32).at[:hidden, :out_dim].set(params["w3"])
    b3 = jnp.zeros((1, OP), f32).at[:, :out_dim].set(params["b3"])

    grid = (NP // TM, NP // TK)
    cparams = pltpu.CompilerParams(
        dimension_semantics=("parallel", "arbitrary"))  # rows split across TCs

    # ---- layer 1: SAGEConv + ReLU ------------------------------------------
    h1 = pl.pallas_call(
        _conv1_kernel,
        out_shape=jax.ShapeDtypeStruct((NP, HP), bf16),
        grid_spec=pltpu.PrefetchScalarGridSpec(
            num_scalar_prefetch=0,
            grid=grid,
            in_specs=[
                pl.BlockSpec((TM, TK), lambda i, k: (i, k)),     # A tile
                pl.BlockSpec((TK, FP), lambda i, k: (k, 0)),     # x (neighbor cols)
                pl.BlockSpec((TM, FP), lambda i, k: (i, 0)),     # x (root rows)
                pl.BlockSpec((2 * FP, HP), lambda i, k: (0, 0)), # fused W
                pl.BlockSpec((1, HP), lambda i, k: (0, 0)),      # bias
            ],
            out_specs=pl.BlockSpec((TM, HP), lambda i, k: (i, 0)),
            scratch_shapes=[pltpu.VMEM((TM, FP), jnp.float32)],
        ),
        compiler_params=cparams,
    )(A_p, x_p, x_p, wcat1, b1)

    # ---- layer 2: SAGEConv + ReLU + final Linear ---------------------------
    out_p = pl.pallas_call(
        _conv2_lin_kernel,
        out_shape=jax.ShapeDtypeStruct((NP, OP), f32),
        grid_spec=pltpu.PrefetchScalarGridSpec(
            num_scalar_prefetch=0,
            grid=grid,
            in_specs=[
                pl.BlockSpec((TM, TK), lambda i, k: (i, k)),     # A tile
                pl.BlockSpec((TK, HP), lambda i, k: (k, 0)),     # h1 (neighbor cols)
                pl.BlockSpec((TM, HP), lambda i, k: (i, 0)),     # h1 (root rows)
                pl.BlockSpec((2 * HP, HP), lambda i, k: (0, 0)), # fused W
                pl.BlockSpec((1, HP), lambda i, k: (0, 0)),      # bias
                pl.BlockSpec((HP, OP), lambda i, k: (0, 0)),     # final Linear W
                pl.BlockSpec((1, OP), lambda i, k: (0, 0)),      # final Linear b
            ],
            out_specs=pl.BlockSpec((TM, OP), lambda i, k: (i, 0)),
            scratch_shapes=[pltpu.VMEM((TM, HP), jnp.float32)],
        ),
        compiler_params=cparams,
    )(A_p, h1, h1, wcat2, b2, w3, b3)

    # Slice padded rows / lanes back to the logical shape.
    return out_p[:N, :out_dim]


# --------------------------------------------------------------------------- #
# Params / reference / test
# --------------------------------------------------------------------------- #
def init_params(key, in_dim, hidden_dim, out_dim):
    """Deterministic synthetic weights (Linear weights stored pre-transposed: (in, out))."""
    ks = jax.random.split(key, 7)

    def u(k, shape, fan_in):
        bound = 1.0 / jnp.sqrt(fan_in)
        return jax.random.uniform(k, shape, jnp.float32, -bound, bound)

    return {
        "wl1": u(ks[0], (in_dim, hidden_dim), in_dim),
        "bl1": u(ks[1], (1, hidden_dim), in_dim),
        "wr1": u(ks[2], (in_dim, hidden_dim), in_dim),
        "wl2": u(ks[3], (hidden_dim, hidden_dim), hidden_dim),
        "bl2": u(ks[4], (1, hidden_dim), hidden_dim),
        "wr2": u(ks[5], (hidden_dim, hidden_dim), hidden_dim),
        "w3": u(ks[6], (hidden_dim, out_dim), hidden_dim),
        "b3": jnp.zeros((1, out_dim), jnp.float32),
    }


def _reference(x, A, params):
    """Pure-JAX f32 reference for correctness check."""
    h = jax.nn.relu(A @ x @ params["wl1"] + params["bl1"] + x @ params["wr1"])
    h = jax.nn.relu(A @ h @ params["wl2"] + params["bl2"] + h @ params["wr2"])
    return h @ params["w3"] + params["b3"]


if __name__ == "__main__":
    N, E = 16, 40            # nodes, edges
    in_dim, hidden_dim, out_dim = 8, 32, 13

    key = jax.random.PRNGKey(0)
    kx, ke, kp = jax.random.split(key, 3)

    x = jax.random.normal(kx, (N, in_dim), jnp.float32)
    edge_index = jax.random.randint(ke, (2, E), 0, N, jnp.int32)
    params = init_params(kp, in_dim, hidden_dim, out_dim)

    # Build the normalized adjacency once per graph and reuse across calls.
    A = build_normalized_adjacency(edge_index, N)

    out = graphsage_regressor(x, A, params)
    out = jax.block_until_ready(out)

    ref = _reference(x, A, params)
    assert out.shape == (N, out_dim)
    # bf16 aggregation path -> slightly looser tolerance vs the f32 reference.
    assert jnp.allclose(out, ref, atol=5e-2, rtol=5e-2), float(
        jnp.max(jnp.abs(out - ref)))

    print("KERNEL_OK")
</pallas_src>

<mosaic_0001>
module attributes {stable_mosaic.version = 11 : i64} {
  func.func @_conv1_kernel(%arg0: i32, %arg1: i32, %arg2: memref<128x128xbf16, #tpu.memory_space<vmem>>, %arg3: memref<128x128xbf16, #tpu.memory_space<vmem>>, %arg4: memref<128x128xbf16, #tpu.memory_space<vmem>>, %arg5: memref<256x128xf32, #tpu.memory_space<vmem>>, %arg6: memref<1x128xf32, #tpu.memory_space<vmem>>, %arg7: memref<128x128xbf16, #tpu.memory_space<vmem>>, %arg8: memref<128x128xf32, #tpu.memory_space<vmem>>) attributes {dimension_semantics = [#tpu.dimension_semantics<parallel>, #tpu.dimension_semantics<arbitrary>], iteration_bounds = array<i64: 1, 1>, scalar_prefetch = 0 : i64, scratch_operands = 1 : i64, tpu.core_type = #tpu.core_type<tc>, window_params = [{transform_indices = @transform_0, window_bounds = array<i64: 128, 128>}, {transform_indices = @transform_1, window_bounds = array<i64: 128, 128>}, {transform_indices = @transform_2, window_bounds = array<i64: 128, 128>}, {pipeline_mode = #tpu.pipeline_mode<synchronous>, transform_indices = @transform_3, window_bounds = array<i64: 256, 128>}, {pipeline_mode = #tpu.pipeline_mode<synchronous>, transform_indices = @transform_4, window_bounds = array<i64: 1, 128>}, {transform_indices = @transform_5, window_bounds = array<i64: 128, 128>}]} {
    %c0_i32 = arith.constant 0 : i32
    %0 = arith.cmpi eq, %arg1, %c0_i32 : i32
    %1 = arith.extui %0 : i1 to i32
    %c0_i32_0 = arith.constant 0 : i32
    %2 = arith.cmpi ne, %1, %c0_i32_0 : i32
    scf.if %2 {
      %cst_10 = arith.constant 0.000000e+00 : f32
      %12 = vector.broadcast %cst_10 : f32 to vector<128x128xf32>
      %c0_11 = arith.constant 0 : index
      %c0_12 = arith.constant 0 : index
      %13 = vector.load %arg8[%c0_11, %c0_12] : memref<128x128xf32, #tpu.memory_space<vmem>>, vector<128x128xf32>
      tpu.vector_store %arg8[%c0_11, %c0_12], %12 {strides = array<i32>} : memref<128x128xf32, #tpu.memory_space<vmem>>, vector<128x128xf32>,
    } else {
    }
    %c0 = arith.constant 0 : index
    %c0_1 = arith.constant 0 : index
    %3 = vector.load %arg8[%c0, %c0_1] : memref<128x128xf32, #tpu.memory_space<vmem>>, vector<128x128xf32>
    %c0_2 = arith.constant 0 : index
    %c0_3 = arith.constant 0 : index
    %4 = vector.load %arg2[%c0_2, %c0_3] : memref<128x128xbf16, #tpu.memory_space<vmem>>, vector<128x128xbf16>
    %c0_4 = arith.constant 0 : index
    %c0_5 = arith.constant 0 : index
    %5 = vector.load %arg3[%c0_4, %c0_5] : memref<128x128xbf16, #tpu.memory_space<vmem>>, vector<128x128xbf16>
    %cst = arith.constant dense<0.000000e+00> : vector<128x128xf32>
    %6 = tpu.matmul %4, %5, %cst {dimension_numbers = #tpu.dot_dimension_numbers<[1], [0], [0], [1], [0, 0, 1, 1], [], []>} : vector<128x128xbf16>, vector<128x128xbf16>, vector<128x128xf32> -> vector<128x128xf32>
    %7 = arith.addf %3, %6 : vector<128x128xf32>
    %c0_6 = arith.constant 0 : index
    %c0_7 = arith.constant 0 : index
    %8 = vector.load %arg8[%c0_6, %c0_7] : memref<128x128xf32, #tpu.memory_space<vmem>>, vector<128x128xf32>
    tpu.vector_store %arg8[%c0_6, %c0_7], %7 {strides = array<i32>} : memref<128x128xf32, #tpu.memory_space<vmem>>, vector<128x128xf32>,
    %c0_i32_8 = arith.constant 0 : i32
    %9 = arith.cmpi eq, %arg1, %c0_i32_8 : i32
    %10 = arith.extui %9 : i1 to i32
    %c0_i32_9 = arith.constant 0 : i32
    %11 = arith.cmpi ne, %10, %c0_i32_9 : i32
    scf.if %11 {
      %c0_10 = arith.constant 0 : index
      %c0_11 = arith.constant 0 : index
      %12 = vector.load %arg4[%c0_10, %c0_11] : memref<128x128xbf16, #tpu.memory_space<vmem>>, vector<128x128xbf16>
      %13 = arith.extf %12 : vector<128x128xbf16> to vector<128x128xf32>
      %c0_12 = arith.constant 0 : index
      %c0_13 = arith.constant 0 : index
      %14 = vector.load %arg8[%c0_12, %c0_13] : memref<128x128xf32, #tpu.memory_space<vmem>>, vector<128x128xf32>
      %15 = tpu.concatenate %14, %13 in 1 : vector<128x128xf32>, vector<128x128xf32> -> vector<128x256xf32>
      %c0_14 = arith.constant 0 : index
      %c0_15 = arith.constant 0 : index
      %16 = vector.load %arg5[%c0_14, %c0_15] : memref<256x128xf32, #tpu.memory_space<vmem>>, vector<256x128xf32>
      %cst_16 = arith.constant dense<0.000000e+00> : vector<128x128xf32>
      %17 = tpu.matmul %15, %16, %cst_16 {dimension_numbers = #tpu.dot_dimension_numbers<[1], [0], [0], [1], [0, 0, 1, 1], [], []>} : vector<128x256xf32>, vector<256x128xf32>, vector<128x128xf32> -> vector<128x128xf32>
      %c0_17 = arith.constant 0 : index
      %c0_18 = arith.constant 0 : index
      %18 = vector.load %arg6[%c0_17, %c0_18] : memref<1x128xf32, #tpu.memory_space<vmem>>, vector<1x128xf32>
      %19 = vector.broadcast %18 : vector<1x128xf32> to vector<128x128xf32>
      %20 = arith.addf %17, %19 : vector<128x128xf32>
      %cst_19 = arith.constant 0.000000e+00 : f32
      %21 = vector.broadcast %cst_19 : f32 to vector<128x128xf32>
      %22 = arith.maximumf %20, %21 : vector<128x128xf32>
      %23 = arith.truncf %22 : vector<128x128xf32> to vector<128x128xbf16>
      %c0_20 = arith.constant 0 : index
      %c0_21 = arith.constant 0 : index
      %24 = vector.load %arg7[%c0_20, %c0_21] : memref<128x128xbf16, #tpu.memory_space<vmem>>, vector<128x128xbf16>
      tpu.vector_store %arg7[%c0_20, %c0_21], %23 {strides = array<i32>} : memref<128x128xbf16, #tpu.memory_space<vmem>>, vector<128x128xbf16>,
    } else {
    }
    return
  }
  func.func @transform_0(%arg0: i32, %arg1: i32) -> (i32, i32) {
    %c0_i32 = arith.constant 0 : i32
    return %arg0, %arg1 : i32, i32
  }
  func.func @transform_1(%arg0: i32, %arg1: i32) -> (i32, i32) {
    %c0_i32 = arith.constant 0 : i32
    %c0_i32_0 = arith.constant 0 : i32
    return %arg1, %c0_i32 : i32, i32
  }
  func.func @transform_2(%arg0: i32, %arg1: i32) -> (i32, i32) {
    %c0_i32 = arith.constant 0 : i32
    %c0_i32_0 = arith.constant 0 : i32
    return %arg0, %c0_i32 : i32, i32
  }
  func.func @transform_3(%arg0: i32, %arg1: i32) -> (i32, i32) {
    %c0_i32 = arith.constant 0 : i32
    %c0_i32_0 = arith.constant 0 : i32
    %c0_i32_1 = arith.constant 0 : i32
    return %c0_i32, %c0_i32_0 : i32, i32
  }
  func.func @transform_4(%arg0: i32, %arg1: i32) -> (i32, i32) {
    %c0_i32 = arith.constant 0 : i32
    %c0_i32_0 = arith.constant 0 : i32
    %c0_i32_1 = arith.constant 0 : i32
    return %c0_i32, %c0_i32_0 : i32, i32
  }
  func.func @transform_5(%arg0: i32, %arg1: i32) -> (i32, i32) {
    %c0_i32 = arith.constant 0 : i32
    %c0_i32_0 = arith.constant 0 : i32
    return %arg0, %c0_i32 : i32, i32
  }
}

</mosaic_0001>

<llo_original>
// kernel: tpu_custom_call.1
$region0: #{tpu_custom_call.1}
  #allocation0 [shape = 'u32[]', space=smem, size = 0x4, offset = 0x4, fixed_abs, tag = 'smem constant byte address 0x4 - core index']
  #allocation1 [shape = 'u32[72,128]{1,0:T(1,128)}', space=vmem, size = 0x9000, scoped, tag = 'internal scratch']
  #allocation2 [shape = 'f32[128,128]{1,0:T(8,128)}', space=vmem, size = 0x10000, scoped, tag = 'scratch operand']
  %s0 = inlined_call_operand.hbm [shape: bf16[128,128], index: 0, kind: input, shape index: {}]
  %s1 = inlined_call_operand.hbm [shape: bf16[128,128], index: 1, kind: input, shape index: {}]
  %s2 = inlined_call_operand.hbm [shape: bf16[128,128], index: 2, kind: input, shape index: {}]
  %s3 = inlined_call_operand.hbm [shape: f32[256,128], index: 3, kind: input, shape index: {}]
  %s4 = inlined_call_operand.vmem [shape: f32[1,128], index: 4, kind: input, shape index: {}]
  %s5 = inlined_call_operand.hbm [shape: bf16[128,128], index: 5, kind: output, shape index: {}]
  %s6 = sld [smem:[#allocation0]]
  $region54: #{tpu_custom_call.1} parent=0
    _
  %s8 = ssub.s32 1, %s6
  %s9 = scalar_select 0, %s8, %s6
  $region1: #{tpu_custom_call.1} parent=0
    #allocation3 [shape = 'u8[32768]{0}', space=vmem, size = 0x8000, scoped, tag = 'input window, operand 0, single buffered']
    #allocation4 [shape = 's32[1]{0}', space=sflag, size = 0x4, scoped, tag = 'scoped memory for tpu_custom_call.1']
    #allocation5 [shape = 's32[1]{0}', space=sflag, size = 0x4, scoped, tag = 'scoped memory for tpu_custom_call.1']
    #allocation6 [shape = 'u8[32768]{0}', space=vmem, size = 0x8000, scoped, tag = 'input window, operand 1, single buffered']
    #allocation7 [shape = 's32[1]{0}', space=sflag, size = 0x4, scoped, tag = 'scoped memory for tpu_custom_call.1']
    #allocation8 [shape = 'u8[32768]{0}', space=vmem, size = 0x8000, scoped, tag = 'input window, operand 2, single buffered']
    #allocation9 [shape = 'u8[131072]{0}', space=vmem, size = 0x20000, scoped, tag = 'input window, operand 3, single buffered']
    #allocation10 [shape = 's32[1]{0}', space=sflag, size = 0x4, scoped, tag = 'scoped memory for tpu_custom_call.1']
    #allocation11 [shape = 'u8[32768]{0}', space=vmem, size = 0x8000, scoped, tag = 'output window, operand 0, single buffered']
    %10 = vsyncpa [#allocation4], 0
    %11 = vsyncpa [#allocation7], 0
    %12 = vsyncpa [#allocation10], 0
    %13 = vsyncpa [#allocation5], 0
    // Predicated region
    $region2: #{tpu_custom_call.1} parent=1 // pred_check
      _
    $region3: #{tpu_custom_call.1} parent=1 // pred_check_branch
      %15 = sbr.rel (0) target = $region5
    $region4: #{tpu_custom_call.1} parent=1 // pred_region
      %17 = vsyncadd [#allocation4], 0
      %s18 = sshll.u32 %s0, 4
      %s19 = int_to_ptr.hbm [resolvable:$true] %s18
      %s20 = sshll.u32 [#allocation3], 4
      %s21 = int_to_ptr.vmem [resolvable:$true] %s20
      %26 = dma.hbm_to_vmem [thread:$0]  %s19, 1024, %s21, [#allocation4], 64, 64, 4
    $region5: #{tpu_custom_call.1} parent=1 // pred_fallthru
      _
    // Predicated region
    $region6: #{tpu_custom_call.1} parent=1 // pred_check
      _
    $region7: #{tpu_custom_call.1} parent=1 // pred_check_branch
      %28 = sbr.rel (0) target = $region9
    $region8: #{tpu_custom_call.1} parent=1 // pred_region
      %30 = vsyncadd [#allocation7], 0
      %s31 = sshll.u32 %s1, 4
      %s32 = int_to_ptr.hbm [resolvable:$true] %s31
      %s33 = sshll.u32 [#allocation6], 4
      %s34 = int_to_ptr.vmem [resolvable:$true] %s33
      %39 = dma.hbm_to_vmem [thread:$0]  %s32, 1024, %s34, [#allocation7], 64, 64, 4
    $region9: #{tpu_custom_call.1} parent=1 // pred_fallthru
      _
    // Predicated region
    $region10: #{tpu_custom_call.1} parent=1 // pred_check
      _
    $region11: #{tpu_custom_call.1} parent=1 // pred_check_branch
      %41 = sbr.rel (0) target = $region13
    $region12: #{tpu_custom_call.1} parent=1 // pred_region
      %43 = vsyncadd [#allocation7], 0
      %s44 = sshll.u32 %s2, 4
      %s45 = int_to_ptr.hbm [resolvable:$true] %s44
      %s46 = sshll.u32 [#allocation8], 4
      %s47 = int_to_ptr.vmem [resolvable:$true] %s46
      %52 = dma.hbm_to_vmem [thread:$0]  %s45, 1024, %s47, [#allocation7], 64, 64, 4
    $region13: #{tpu_custom_call.1} parent=1 // pred_fallthru
      _
    // Predicated region
    $region14: #{tpu_custom_call.1} parent=1 // pred_check
      _
    $region15: #{tpu_custom_call.1} parent=1 // pred_check_branch
      %54 = sbr.rel (0) target = $region17
    $region16: #{tpu_custom_call.1} parent=1 // pred_region
      %56 = vsyncadd [#allocation10], 0
      %s57 = sshll.u32 %s3, 4
      %s58 = int_to_ptr.hbm [resolvable:$true] %s57
      %s59 = sshll.u32 [#allocation9], 4
      %s60 = int_to_ptr.vmem [resolvable:$true] %s59
      %65 = dma.hbm_to_vmem [thread:$0]  %s58, 4096, %s60, [#allocation10], 128, 128, 8
    $region17: #{tpu_custom_call.1} parent=1 // pred_fallthru
      _
    // Predicated region
    $region18: #{tpu_custom_call.1} parent=1 // pred_check
      _
    $region19: #{tpu_custom_call.1} parent=1 // pred_check_branch
      %67 = sbr.rel (0) target = $region21
    $region20: #{tpu_custom_call.1} parent=1 // pred_region
      _
    $region21: #{tpu_custom_call.1} parent=1 // pred_fallthru
      _
    // Predicated region
    $region22: #{tpu_custom_call.1} parent=1 // pred_check
      _
    $region23: #{tpu_custom_call.1} parent=1 // pred_check_branch
      %69 = sbr.rel (0) target = $region25
    $region24: #{tpu_custom_call.1} parent=1 // pred_region
      %71 = dma.done [#allocation4], 1024
    $region25: #{tpu_custom_call.1} parent=1 // pred_fallthru
      _
    // Predicated region
    $region26: #{tpu_custom_call.1} parent=1 // pred_check
      _
    $region27: #{tpu_custom_call.1} parent=1 // pred_check_branch
      %73 = sbr.rel (0) target = $region29
    $region28: #{tpu_custom_call.1} parent=1 // pred_region
      %75 = dma.done [#allocation7], 1024
    $region29: #{tpu_custom_call.1} parent=1 // pred_fallthru
      _
    // Predicated region
    $region30: #{tpu_custom_call.1} parent=1 // pred_check
      _
    $region31: #{tpu_custom_call.1} parent=1 // pred_check_branch
      %77 = sbr.rel (0) target = $region33
    $region32: #{tpu_custom_call.1} parent=1 // pred_region
      %79 = dma.done [#allocation7], 1024
    $region33: #{tpu_custom_call.1} parent=1 // pred_fallthru
      _
    // Predicated region
    $region34: #{tpu_custom_call.1} parent=1 // pred_check
      _
    $region35: #{tpu_custom_call.1} parent=1 // pred_check_branch
      %81 = sbr.rel (0) target = $region37
    $region36: #{tpu_custom_call.1} parent=1 // pred_region
      %83 = dma.done [#allocation10], 4096
    $region37: #{tpu_custom_call.1} parent=1 // pred_fallthru
      _
    %p84 = scmp.eq.s32.totalorder 0, 0
    // Predicated region
    $region38: #{tpu_custom_call.1} parent=1 // pred_check
      %p85 = pneg %p84
    $region39: #{tpu_custom_call.1} parent=1 // pred_check_branch
      %87 = sbr.rel (%p85) target = $region41
    $region40: #{tpu_custom_call.1} parent=1 // pred_region
      %88 = vst [vmem:[#allocation2] sm:$0xff] 0.0
      %89 = vst [vmem:[#allocation2 + $0x8] sm:$0xff] 0.0
      %90 = vst [vmem:[#allocation2 + $0x10] sm:$0xff] 0.0
      %91 = vst [vmem:[#allocation2 + $0x18] sm:$0xff] 0.0
      %92 = vst [vmem:[#allocation2 + $0x20] sm:$0xff] 0.0
      %93 = vst [vmem:[#allocation2 + $0x28] sm:$0xff] 0.0
      %94 = vst [vmem:[#allocation2 + $0x30] sm:$0xff] 0.0
      %95 = vst [vmem:[#allocation2 + $0x38] sm:$0xff] 0.0
      %96 = vst [vmem:[#allocation2 + $0x40] sm:$0xff] 0.0
      %97 = vst [vmem:[#allocation2 + $0x48] sm:$0xff] 0.0
      %98 = vst [vmem:[#allocation2 + $0x50] sm:$0xff] 0.0
      %99 = vst [vmem:[#allocation2 + $0x58] sm:$0xff] 0.0
      %100 = vst [vmem:[#allocation2 + $0x60] sm:$0xff] 0.0
      %101 = vst [vmem:[#allocation2 + $0x68] sm:$0xff] 0.0
      %102 = vst [vmem:[#allocation2 + $0x70] sm:$0xff] 0.0
      %103 = vst [vmem:[#allocation2 + $0x78] sm:$0xff] 0.0
    $region41: #{tpu_custom_call.1} parent=1 // pred_fallthru
      _
    %v104 = vld [vmem:[#allocation2] sm:$0xff]
    %v105 = vld [vmem:[#allocation2 + $0x8] sm:$0xff]
    %v106 = vld [vmem:[#allocation2 + $0x10] sm:$0xff]
    %v107 = vld [vmem:[#allocation2 + $0x18] sm:$0xff]
    %v108 = vld [vmem:[#allocation2 + $0x20] sm:$0xff]
    %v109 = vld [vmem:[#allocation2 + $0x28] sm:$0xff]
    %v110 = vld [vmem:[#allocation2 + $0x30] sm:$0xff]
    %v111 = vld [vmem:[#allocation2 + $0x38] sm:$0xff]
    %v112 = vld [vmem:[#allocation2 + $0x40] sm:$0xff]
    %v113 = vld [vmem:[#allocation2 + $0x48] sm:$0xff]
    %v114 = vld [vmem:[#allocation2 + $0x50] sm:$0xff]
    %v115 = vld [vmem:[#allocation2 + $0x58] sm:$0xff]
    %v116 = vld [vmem:[#allocation2 + $0x60] sm:$0xff]
    %v117 = vld [vmem:[#allocation2 + $0x68] sm:$0xff]
    %v118 = vld [vmem:[#allocation2 + $0x70] sm:$0xff]
    %v119 = vld [vmem:[#allocation2 + $0x78] sm:$0xff]
    %v120 = vld [vmem:[#allocation3] sm:$0xf]
    %v121 = vld [vmem:[#allocation3 + $0x4] sm:$0xf]
    %v122 = vld [vmem:[#allocation3 + $0x8] sm:$0xf]
    %v123 = vld [vmem:[#allocation3 + $0xc] sm:$0xf]
    %v124 = vld [vmem:[#allocation3 + $0x10] sm:$0xf]
    %v125 = vld [vmem:[#allocation3 + $0x14] sm:$0xf]
    %v126 = vld [vmem:[#allocation3 + $0x18] sm:$0xf]
    %v127 = vld [vmem:[#allocation3 + $0x1c] sm:$0xf]
    %v128 = vld [vmem:[#allocation3 + $0x20] sm:$0xf]
    %v129 = vld [vmem:[#allocation3 + $0x24] sm:$0xf]
    %v130 = vld [vmem:[#allocation3 + $0x28] sm:$0xf]
    %v131 = vld [vmem:[#allocation3 + $0x2c] sm:$0xf]
    %v132 = vld [vmem:[#allocation3 + $0x30] sm:$0xf]
    %v133 = vld [vmem:[#allocation3 + $0x34] sm:$0xf]
    %v134 = vld [vmem:[#allocation3 + $0x38] sm:$0xf]
    %v135 = vld [vmem:[#allocation3 + $0x3c] sm:$0xf]
    %v136 = vld [vmem:[#allocation6] sm:$0xf]
    %v137 = vld [vmem:[#allocation6 + $0x4] sm:$0xf]
    %v138 = vld [vmem:[#allocation6 + $0x8] sm:$0xf]
    %v139 = vld [vmem:[#allocation6 + $0xc] sm:$0xf]
    %v140 = vld [vmem:[#allocation6 + $0x10] sm:$0xf]
    %v141 = vld [vmem:[#allocation6 + $0x14] sm:$0xf]
    %v142 = vld [vmem:[#allocation6 + $0x18] sm:$0xf]
    %v143 = vld [vmem:[#allocation6 + $0x1c] sm:$0xf]
    %v144 = vld [vmem:[#allocation6 + $0x20] sm:$0xf]
    %v145 = vld [vmem:[#allocation6 + $0x24] sm:$0xf]
    %v146 = vld [vmem:[#allocation6 + $0x28] sm:$0xf]
    %v147 = vld [vmem:[#allocation6 + $0x2c] sm:$0xf]
    %v148 = vld [vmem:[#allocation6 + $0x30] sm:$0xf]
    %v149 = vld [vmem:[#allocation6 + $0x34] sm:$0xf]
    %v150 = vld [vmem:[#allocation6 + $0x38] sm:$0xf]
    %v151 = vld [vmem:[#allocation6 + $0x3c] sm:$0xf]
    %v168 = vunpack.c.l.b16 %v120
    %v169 = vunpack.c.l.b16 %v121
    %v170 = vunpack.c.l.b16 %v122
    %v171 = vunpack.c.l.b16 %v123
    %v172 = vunpack.c.l.b16 %v124
    %v173 = vunpack.c.l.b16 %v125
    %v174 = vunpack.c.l.b16 %v126
    %v175 = vunpack.c.l.b16 %v127
    %v176 = vunpack.c.l.b16 %v128
    %v177 = vunpack.c.l.b16 %v129
    %v178 = vunpack.c.l.b16 %v130
    %v179 = vunpack.c.l.b16 %v131
    %v180 = vunpack.c.l.b16 %v132
    %v181 = vunpack.c.l.b16 %v133
    %v182 = vunpack.c.l.b16 %v134
    %v183 = vunpack.c.l.b16 %v135
    %v184 = vpack.c.b16 %v169, %v168
    %v185 = vpack.c.b16 %v171, %v170
    %v186 = vpack.c.b16 %v173, %v172
    %v187 = vpack.c.b16 %v175, %v174
    %v188 = vpack.c.b16 %v177, %v176
    %v189 = vpack.c.b16 %v179, %v178
    %v190 = vpack.c.b16 %v181, %v180
    %v191 = vpack.c.b16 %v183, %v182
    %v216 = vunpack.c.l.b16 %v136
    %v217 = vunpack.c.l.b16 %v137
    %v218 = vunpack.c.l.b16 %v138
    %v219 = vunpack.c.l.b16 %v139
    %v220 = vunpack.c.l.b16 %v140
    %v221 = vunpack.c.l.b16 %v141
    %v222 = vunpack.c.l.b16 %v142
    %v223 = vunpack.c.l.b16 %v143
    %v224 = vunpack.c.l.b16 %v144
    %v225 = vunpack.c.l.b16 %v145
    %v226 = vunpack.c.l.b16 %v146
    %v227 = vunpack.c.l.b16 %v147
    %v228 = vunpack.c.l.b16 %v148
    %v229 = vunpack.c.l.b16 %v149
    %v230 = vunpack.c.l.b16 %v150
    %v231 = vunpack.c.l.b16 %v151
    %v232 = vpack.c.b16 %v217, %v216
    %v233 = vpack.c.b16 %v219, %v218
    %v234 = vpack.c.b16 %v221, %v220
    %v235 = vpack.c.b16 %v223, %v222
    %v236 = vpack.c.b16 %v225, %v224
    %v237 = vpack.c.b16 %v227, %v226
    %v238 = vpack.c.b16 %v229, %v228
    %v239 = vpack.c.b16 %v231, %v230
    %248 = vmatpush.bf16.msra.mxu0 %v239
    %249 = vmatpush.bf16.msra.mxu0 %v238
    %250 = vmatpush.bf16.msra.mxu0 %v237
    %251 = vmatpush.bf16.msra.mxu0 %v236
    %252 = vmatpush.bf16.msra.mxu0 %v235
    %253 = vmatpush.bf16.msra.mxu0 %v234
    %254 = vmatpush.bf16.msra.mxu0 %v233
    %255 = vmatpush.bf16.msra.mxu0 %v232
    %256 = vmatmul.bf16.gmra.mxu0 %v184
    %v257 = vpop.f32.mrf.mxu0
    %v258 = vadd.f32 0.0, %v257
    %v259 = vpop.f32.mrf.mxu0
    %v260 = vadd.f32 0.0, %v259
    %261 = vmatmul.bf16.gmra.mxu0 %v185
    %v262 = vpop.f32.mrf.mxu0
    %v263 = vadd.f32 0.0, %v262
    %v264 = vpop.f32.mrf.mxu0
    %v265 = vadd.f32 0.0, %v264
    %266 = vmatmul.bf16.gmra.mxu0 %v186
    %v267 = vpop.f32.mrf.mxu0
    %v268 = vadd.f32 0.0, %v267
    %v269 = vpop.f32.mrf.mxu0
    %v270 = vadd.f32 0.0, %v269
    %271 = vmatmul.bf16.gmra.mxu0 %v187
    %v272 = vpop.f32.mrf.mxu0
    %v273 = vadd.f32 0.0, %v272
    %v274 = vpop.f32.mrf.mxu0
    %v275 = vadd.f32 0.0, %v274
    %276 = vmatmul.bf16.gmra.mxu0 %v188
    %v277 = vpop.f32.mrf.mxu0
    %v278 = vadd.f32 0.0, %v277
    %v279 = vpop.f32.mrf.mxu0
    %v280 = vadd.f32 0.0, %v279
    %281 = vmatmul.bf16.gmra.mxu0 %v189
    %v282 = vpop.f32.mrf.mxu0
    %v283 = vadd.f32 0.0, %v282
    %v284 = vpop.f32.mrf.mxu0
    %v285 = vadd.f32 0.0, %v284
    %286 = vmatmul.bf16.gmra.mxu0 %v190
    %v287 = vpop.f32.mrf.mxu0
    %v288 = vadd.f32 0.0, %v287
    %v289 = vpop.f32.mrf.mxu0
    %v290 = vadd.f32 0.0, %v289
    %291 = vmatmul.bf16.gmra.mxu0 %v191
    %v292 = vpop.f32.mrf.mxu0
    %v293 = vadd.f32 0.0, %v292
    %v294 = vpop.f32.mrf.mxu0
    %v295 = vadd.f32 0.0, %v294
    %296 = vdwg.mxu0
    %v297 = vadd.f32 %v104, %v258
    %v298 = vadd.f32 %v105, %v260
    %v299 = vadd.f32 %v106, %v263
    %v300 = vadd.f32 %v107, %v265
    %v301 = vadd.f32 %v108, %v268
    %v302 = vadd.f32 %v109, %v270
    %v303 = vadd.f32 %v110, %v273
    %v304 = vadd.f32 %v111, %v275
    %v305 = vadd.f32 %v112, %v278
    %v306 = vadd.f32 %v113, %v280
    %v307 = vadd.f32 %v114, %v283
    %v308 = vadd.f32 %v115, %v285
    %v309 = vadd.f32 %v116, %v288
    %v310 = vadd.f32 %v117, %v290
    %v311 = vadd.f32 %v118, %v293
    %v312 = vadd.f32 %v119, %v295
    %313 = vst [vmem:[#allocation2] sm:$0xff] %v297
    %314 = vst [vmem:[#allocation2 + $0x8] sm:$0xff] %v298
    %315 = vst [vmem:[#allocation2 + $0x10] sm:$0xff] %v299
    %316 = vst [vmem:[#allocation2 + $0x18] sm:$0xff] %v300
    %317 = vst [vmem:[#allocation2 + $0x20] sm:$0xff] %v301
    %318 = vst [vmem:[#allocation2 + $0x28] sm:$0xff] %v302
    %319 = vst [vmem:[#allocation2 + $0x30] sm:$0xff] %v303
    %320 = vst [vmem:[#allocation2 + $0x38] sm:$0xff] %v304
    %321 = vst [vmem:[#allocation2 + $0x40] sm:$0xff] %v305
    %322 = vst [vmem:[#allocation2 + $0x48] sm:$0xff] %v306
    %323 = vst [vmem:[#allocation2 + $0x50] sm:$0xff] %v307
    %324 = vst [vmem:[#allocation2 + $0x58] sm:$0xff] %v308
    %325 = vst [vmem:[#allocation2 + $0x60] sm:$0xff] %v309
    %326 = vst [vmem:[#allocation2 + $0x68] sm:$0xff] %v310
    %327 = vst [vmem:[#allocation2 + $0x70] sm:$0xff] %v311
    %328 = vst [vmem:[#allocation2 + $0x78] sm:$0xff] %v312
    // Predicated region
    $region42: #{tpu_custom_call.1} parent=1 // pred_check
      %p329 = pneg %p84
    $region43: #{tpu_custom_call.1} parent=1 // pred_check_branch
      %331 = sbr.rel (%p329) target = $region45
    $region44: #{tpu_custom_call.1} parent=1 // pred_region
      %v332 = vld [vmem:[#allocation8] sm:$0xf]
      %v333 = vld [vmem:[#allocation8 + $0x4] sm:$0xf]
      %v334 = vld [vmem:[#allocation8 + $0x8] sm:$0xf]
      %v335 = vld [vmem:[#allocation8 + $0xc] sm:$0xf]
      %v336 = vld [vmem:[#allocation8 + $0x10] sm:$0xf]
      %v337 = vld [vmem:[#allocation8 + $0x14] sm:$0xf]
      %v338 = vld [vmem:[#allocation8 + $0x18] sm:$0xf]
      %v339 = vld [vmem:[#allocation8 + $0x1c] sm:$0xf]
      %v340 = vld [vmem:[#allocation8 + $0x20] sm:$0xf]
      %v341 = vld [vmem:[#allocation8 + $0x24] sm:$0xf]
      %v342 = vld [vmem:[#allocation8 + $0x28] sm:$0xf]
      %v343 = vld [vmem:[#allocation8 + $0x2c] sm:$0xf]
      %v344 = vld [vmem:[#allocation8 + $0x30] sm:$0xf]
      %v345 = vld [vmem:[#allocation8 + $0x34] sm:$0xf]
      %v346 = vld [vmem:[#allocation8 + $0x38] sm:$0xf]
      %v347 = vld [vmem:[#allocation8 + $0x3c] sm:$0xf]
      %v348 = vunpack.c.l.bf16 %v332
      %v349 = vunpack.c.l.bf16 %v333
      %v350 = vunpack.c.l.bf16 %v334
      %v351 = vunpack.c.l.bf16 %v335
      %v352 = vunpack.c.l.bf16 %v336
      %v353 = vunpack.c.l.bf16 %v337
      %v354 = vunpack.c.l.bf16 %v338
      %v355 = vunpack.c.l.bf16 %v339
      %v356 = vunpack.c.l.bf16 %v340
      %v357 = vunpack.c.l.bf16 %v341
      %v358 = vunpack.c.l.bf16 %v342
      %v359 = vunpack.c.l.bf16 %v343
      %v360 = vunpack.c.l.bf16 %v344
      %v361 = vunpack.c.l.bf16 %v345
      %v362 = vunpack.c.l.bf16 %v346
      %v363 = vunpack.c.l.bf16 %v347
      %v364 = vld [vmem:[#allocation2] sm:$0xff]
      %v365 = vld [vmem:[#allocation2 + $0x8] sm:$0xff]
      %v366 = vld [vmem:[#allocation2 + $0x10] sm:$0xff]
      %v367 = vld [vmem:[#allocation2 + $0x18] sm:$0xff]
      %v368 = vld [vmem:[#allocation2 + $0x20] sm:$0xff]
      %v369 = vld [vmem:[#allocation2 + $0x28] sm:$0xff]
      %v370 = vld [vmem:[#allocation2 + $0x30] sm:$0xff]
      %v371 = vld [vmem:[#allocation2 + $0x38] sm:$0xff]
      %v372 = vld [vmem:[#allocation2 + $0x40] sm:$0xff]
      %v373 = vld [vmem:[#allocation2 + $0x48] sm:$0xff]
      %v374 = vld [vmem:[#allocation2 + $0x50] sm:$0xff]
      %v375 = vld [vmem:[#allocation2 + $0x58] sm:$0xff]
      %v376 = vld [vmem:[#allocation2 + $0x60] sm:$0xff]
      %v377 = vld [vmem:[#allocation2 + $0x68] sm:$0xff]
      %v378 = vld [vmem:[#allocation2 + $0x70] sm:$0xff]
      %v379 = vld [vmem:[#allocation2 + $0x78] sm:$0xff]
      %v380 = vld [vmem:[#allocation9] sm:$0xff]
      %v381 = vld [vmem:[#allocation9 + $0x8] sm:$0xff]
      %v382 = vld [vmem:[#allocation9 + $0x10] sm:$0xff]
      %v383 = vld [vmem:[#allocation9 + $0x18] sm:$0xff]
      %v384 = vld [vmem:[#allocation9 + $0x20] sm:$0xff]
      %v385 = vld [vmem:[#allocation9 + $0x28] sm:$0xff]
      %v386 = vld [vmem:[#allocation9 + $0x30] sm:$0xff]
      %v387 = vld [vmem:[#allocation9 + $0x38] sm:$0xff]
      %v388 = vld [vmem:[#allocation9 + $0x40] sm:$0xff]
      %v389 = vld [vmem:[#allocation9 + $0x48] sm:$0xff]
      %v390 = vld [vmem:[#allocation9 + $0x50] sm:$0xff]
      %v391 = vld [vmem:[#allocation9 + $0x58] sm:$0xff]
      %v392 = vld [vmem:[#allocation9 + $0x60] sm:$0xff]
      %v393 = vld [vmem:[#allocation9 + $0x68] sm:$0xff]
      %v394 = vld [vmem:[#allocation9 + $0x70] sm:$0xff]
      %v395 = vld [vmem:[#allocation9 + $0x78] sm:$0xff]
      %v396 = vld [vmem:[#allocation9 + $0x80] sm:$0xff]
      %v397 = vld [vmem:[#allocation9 + $0x88] sm:$0xff]
      %v398 = vld [vmem:[#allocation9 + $0x90] sm:$0xff]
      %v399 = vld [vmem:[#allocation9 + $0x98] sm:$0xff]
      %v400 = vld [vmem:[#allocation9 + $0xa0] sm:$0xff]
      %v401 = vld [vmem:[#allocation9 + $0xa8] sm:$0xff]
      %v402 = vld [vmem:[#allocation9 + $0xb0] sm:$0xff]
      %v403 = vld [vmem:[#allocation9 + $0xb8] sm:$0xff]
      %v404 = vld [vmem:[#allocation9 + $0xc0] sm:$0xff]
      %v405 = vld [vmem:[#allocation9 + $0xc8] sm:$0xff]
      %v406 = vld [vmem:[#allocation9 + $0xd0] sm:$0xff]
      %v407 = vld [vmem:[#allocation9 + $0xd8] sm:$0xff]
      %v408 = vld [vmem:[#allocation9 + $0xe0] sm:$0xff]
      %v409 = vld [vmem:[#allocation9 + $0xe8] sm:$0xff]
      %v410 = vld [vmem:[#allocation9 + $0xf0] sm:$0xff]
      %v411 = vld [vmem:[#allocation9 + $0xf8] sm:$0xff]
      %v412 = vld [vmem:[%s4] sm:$0x1]
      %v414 = vperm.slane %v412, 0
      %416 = vmatpush.msra.mxu0 %v395
      %417 = vmatpush.msra.mxu0 %v394
      %418 = vmatpush.msra.mxu0 %v393
      %419 = vmatpush.msra.mxu0 %v392
      %420 = vmatpush.msra.mxu0 %v391
      %421 = vmatpush.msra.mxu0 %v390
      %422 = vmatpush.msra.mxu0 %v389
      %423 = vmatpush.msra.mxu0 %v388
      %424 = vmatpush.msra.mxu0 %v387
      %425 = vmatpush.msra.mxu0 %v386
      %426 = vmatpush.msra.mxu0 %v385
      %427 = vmatpush.msra.mxu0 %v384
      %428 = vmatpush.msra.mxu0 %v383
      %429 = vmatpush.msra.mxu0 %v382
      %430 = vmatpush.msra.mxu0 %v381
      %431 = vmatpush.msra.mxu0 %v380
      %432 = vmatmul.f32.gmra.mxu0 %v364
      %v433 = vpop.f32.mrf.mxu0
      %v434 = vadd.f32 %v414, %v433
      %435 = vmatmul.f32.gmra.mxu0 %v365
      %v436 = vpop.f32.mrf.mxu0
      %v437 = vadd.f32 %v414, %v436
      %438 = vmatmul.f32.gmra.mxu0 %v366
      %v439 = vpop.f32.mrf.mxu0
      %v440 = vadd.f32 %v414, %v439
      %441 = vmatmul.f32.gmra.mxu0 %v367
      %v442 = vpop.f32.mrf.mxu0
      %v443 = vadd.f32 %v414, %v442
      %444 = vmatmul.f32.gmra.mxu0 %v368
      %v445 = vpop.f32.mrf.mxu0
      %v446 = vadd.f32 %v414, %v445
      %447 = vmatmul.f32.gmra.mxu0 %v369
      %v448 = vpop.f32.mrf.mxu0
      %v449 = vadd.f32 %v414, %v448
      %450 = vmatmul.f32.gmra.mxu0 %v370
      %v451 = vpop.f32.mrf.mxu0
      %v452 = vadd.f32 %v414, %v451
      %453 = vmatmul.f32.gmra.mxu0 %v371
      %v454 = vpop.f32.mrf.mxu0
      %v455 = vadd.f32 %v414, %v454
      %456 = vmatmul.f32.gmra.mxu0 %v372
      %v457 = vpop.f32.mrf.mxu0
      %v458 = vadd.f32 %v414, %v457
      %459 = vmatmul.f32.gmra.mxu0 %v373
      %v460 = vpop.f32.mrf.mxu0
      %v461 = vadd.f32 %v414, %v460
      %462 = vmatmul.f32.gmra.mxu0 %v374
      %v463 = vpop.f32.mrf.mxu0
      %v464 = vadd.f32 %v414, %v463
      %465 = vmatmul.f32.gmra.mxu0 %v375
      %v466 = vpop.f32.mrf.mxu0
      %v467 = vadd.f32 %v414, %v466
      %468 = vmatmul.f32.gmra.mxu0 %v376
      %v469 = vpop.f32.mrf.mxu0
      %v470 = vadd.f32 %v414, %v469
      %471 = vmatmul.f32.gmra.mxu0 %v377
      %v472 = vpop.f32.mrf.mxu0
      %v473 = vadd.f32 %v414, %v472
      %474 = vmatmul.f32.gmra.mxu0 %v378
      %v475 = vpop.f32.mrf.mxu0
      %v476 = vadd.f32 %v414, %v475
      %477 = vmatmul.f32.gmra.mxu0 %v379
      %v478 = vpop.f32.mrf.mxu0
      %v479 = vadd.f32 %v414, %v478
      %480 = vdwg.mxu0
      %481 = vmatpush.msra.mxu0 %v411
      %482 = vmatpush.msra.mxu0 %v410
      %483 = vmatpush.msra.mxu0 %v409
      %484 = vmatpush.msra.mxu0 %v408
      %485 = vmatpush.msra.mxu0 %v407
      %486 = vmatpush.msra.mxu0 %v406
      %487 = vmatpush.msra.mxu0 %v405
      %488 = vmatpush.msra.mxu0 %v404
      %489 = vmatpush.msra.mxu0 %v403
      %490 = vmatpush.msra.mxu0 %v402
      %491 = vmatpush.msra.mxu0 %v401
      %492 = vmatpush.msra.mxu0 %v400
      %493 = vmatpush.msra.mxu0 %v399
      %494 = vmatpush.msra.mxu0 %v398
      %495 = vmatpush.msra.mxu0 %v397
      %496 = vmatpush.msra.mxu0 %v396
      %497 = vmatmul.f32.gmra.mxu0 %v348
      %v498 = vpop.f32.mrf.mxu0
      %v499 = vadd.f32 %v434, %v498
      %500 = vmatmul.f32.gmra.mxu0 %v349
      %v501 = vpop.f32.mrf.mxu0
      %v502 = vadd.f32 %v437, %v501
      %503 = vmatmul.f32.gmra.mxu0 %v350
      %v504 = vpop.f32.mrf.mxu0
      %v505 = vadd.f32 %v440, %v504
      %506 = vmatmul.f32.gmra.mxu0 %v351
      %v507 = vpop.f32.mrf.mxu0
      %v508 = vadd.f32 %v443, %v507
      %509 = vmatmul.f32.gmra.mxu0 %v352
      %v510 = vpop.f32.mrf.mxu0
      %v511 = vadd.f32 %v446, %v510
      %512 = vmatmul.f32.gmra.mxu0 %v353
      %v513 = vpop.f32.mrf.mxu0
      %v514 = vadd.f32 %v449, %v513
      %515 = vmatmul.f32.gmra.mxu0 %v354
      %v516 = vpop.f32.mrf.mxu0
      %v517 = vadd.f32 %v452, %v516
      %518 = vmatmul.f32.gmra.mxu0 %v355
      %v519 = vpop.f32.mrf.mxu0
      %v520 = vadd.f32 %v455, %v519
      %521 = vmatmul.f32.gmra.mxu0 %v356
      %v522 = vpop.f32.mrf.mxu0
      %v523 = vadd.f32 %v458, %v522
      %524 = vmatmul.f32.gmra.mxu0 %v357
      %v525 = vpop.f32.mrf.mxu0
      %v526 = vadd.f32 %v461, %v525
      %527 = vmatmul.f32.gmra.mxu0 %v358
      %v528 = vpop.f32.mrf.mxu0
      %v529 = vadd.f32 %v464, %v528
      %530 = vmatmul.f32.gmra.mxu0 %v359
      %v531 = vpop.f32.mrf.mxu0
      %v532 = vadd.f32 %v467, %v531
      %533 = vmatmul.f32.gmra.mxu0 %v360
      %v534 = vpop.f32.mrf.mxu0
      %v535 = vadd.f32 %v470, %v534
      %536 = vmatmul.f32.gmra.mxu0 %v361
      %v537 = vpop.f32.mrf.mxu0
      %v538 = vadd.f32 %v473, %v537
      %539 = vmatmul.f32.gmra.mxu0 %v362
      %v540 = vpop.f32.mrf.mxu0
      %v541 = vadd.f32 %v476, %v540
      %542 = vmatmul.f32.gmra.mxu0 %v363
      %v543 = vpop.f32.mrf.mxu0
      %v544 = vadd.f32 %v479, %v543
      %545 = vdwg.mxu0
      %v546 = vmax.f32 %v499, 0.0
      %v547 = vmax.f32 %v502, 0.0
      %v548 = vmax.f32 %v505, 0.0
      %v549 = vmax.f32 %v508, 0.0
      %v550 = vmax.f32 %v511, 0.0
      %v551 = vmax.f32 %v514, 0.0
      %v552 = vmax.f32 %v517, 0.0
      %v553 = vmax.f32 %v520, 0.0
      %v554 = vmax.f32 %v523, 0.0
      %v555 = vmax.f32 %v526, 0.0
      %v556 = vmax.f32 %v529, 0.0
      %v557 = vmax.f32 %v532, 0.0
      %v558 = vmax.f32 %v535, 0.0
      %v559 = vmax.f32 %v538, 0.0
      %v560 = vmax.f32 %v541, 0.0
      %v561 = vmax.f32 %v544, 0.0
      %v562 = vpack.c.bf16 %v546, %v546
      %v563 = vpack.c.bf16 %v547, %v547
      %v564 = vpack.c.bf16 %v548, %v548
      %v565 = vpack.c.bf16 %v549, %v549
      %v566 = vpack.c.bf16 %v550, %v550
      %v567 = vpack.c.bf16 %v551, %v551
      %v568 = vpack.c.bf16 %v552, %v552
      %v569 = vpack.c.bf16 %v553, %v553
      %v570 = vpack.c.bf16 %v554, %v554
      %v571 = vpack.c.bf16 %v555, %v555
      %v572 = vpack.c.bf16 %v556, %v556
      %v573 = vpack.c.bf16 %v557, %v557
      %v574 = vpack.c.bf16 %v558, %v558
      %v575 = vpack.c.bf16 %v559, %v559
      %v576 = vpack.c.bf16 %v560, %v560
      %v577 = vpack.c.bf16 %v561, %v561
      %578 = vst [vmem:[#allocation11] sm:$0xf] %v562
      %579 = vst [vmem:[#allocation11 + $0x4] sm:$0xf] %v563
      %580 = vst [vmem:[#allocation11 + $0x8] sm:$0xf] %v564
      %581 = vst [vmem:[#allocation11 + $0xc] sm:$0xf] %v565
      %582 = vst [vmem:[#allocation11 + $0x10] sm:$0xf] %v566
      %583 = vst [vmem:[#allocation11 + $0x14] sm:$0xf] %v567
      %584 = vst [vmem:[#allocation11 + $0x18] sm:$0xf] %v568
      %585 = vst [vmem:[#allocation11 + $0x1c] sm:$0xf] %v569
      %586 = vst [vmem:[#allocation11 + $0x20] sm:$0xf] %v570
      %587 = vst [vmem:[#allocation11 + $0x24] sm:$0xf] %v571
      %588 = vst [vmem:[#allocation11 + $0x28] sm:$0xf] %v572
      %589 = vst [vmem:[#allocation11 + $0x2c] sm:$0xf] %v573
      %590 = vst [vmem:[#allocation11 + $0x30] sm:$0xf] %v574
      %591 = vst [vmem:[#allocation11 + $0x34] sm:$0xf] %v575
      %592 = vst [vmem:[#allocation11 + $0x38] sm:$0xf] %v576
      %593 = vst [vmem:[#allocation11 + $0x3c] sm:$0xf] %v577
    $region45: #{tpu_custom_call.1} parent=1 // pred_fallthru
      _
    // Predicated region
    $region46: #{tpu_custom_call.1} parent=1 // pred_check
      _
    $region47: #{tpu_custom_call.1} parent=1 // pred_check_branch
      %595 = sbr.rel (0) target = $region49
    $region48: #{tpu_custom_call.1} parent=1 // pred_region
      %597 = vsyncadd [#allocation5], 0
      %s598 = sshll.u32 [#allocation11], 4
      %s599 = int_to_ptr.vmem [resolvable:$true] %s598
      %s600 = sshll.u32 %s5, 4
      %s601 = int_to_ptr.hbm [resolvable:$true] %s600
      %606 = dma.vmem_to_hbm [thread:$0]  %s599, 1024, %s601, [#allocation5], 64, 64, 4
    $region49: #{tpu_custom_call.1} parent=1 // pred_fallthru
      _
    // Predicated region
    $region50: #{tpu_custom_call.1} parent=1 // pred_check
      _
    $region51: #{tpu_custom_call.1} parent=1 // pred_check_branch
      %608 = sbr.rel (0) target = $region53
    $region52: #{tpu_custom_call.1} parent=1 // pred_region
      %610 = dma.done [#allocation5], 1024
    $region53: #{tpu_custom_call.1} parent=1 // pred_fallthru
      _
    %611 = vsyncpa [#allocation4], 1
    %612 = vsyncpa [#allocation7], 1
    %613 = vsyncpa [#allocation10], 1
    %614 = vsyncpa [#allocation5], 1

</llo_original>
